<compile_context>
chip_gen: v6e
topology: v6e:2x2x1
jax: 0.10.0
libtpu: 0.0.40
codegen_flags: <defaults>
</compile_context>

<pallas_src>
import numpy as np
import jax
import jax.numpy as jnp
from jax.experimental import pallas as pl
from jax.experimental.pallas import tpu as pltpu

# ---------------- config (small, deterministic) ----------------
BATCH = 2
SEQ = 8            # max_position_embeddings
HIDDEN = 32        # hidden_size
INTER = 64         # intermediate_size
LN_EPS = 1e-12     # layer_norm_eps
# TODO(synk): dropout is stochastic in train mode; implemented as identity (eval).

# ---- bf16 weight-slab row offsets (16-row = bf16 sublane-tile aligned) ----
def _align16(n):
    return (n + 15) // 16 * 16

R_FS = 0                                   # [blockdiag(Fs_re); blockdiag(Fs_im)]  (2*B*S, B*S)
R_FH = _align16(R_FS + 2 * BATCH * SEQ)    # [Fh_re; Fh_im]                        (2H, H)
R_FF = _align16(R_FH + 2 * HIDDEN)         # feed_forward weight                   (H, I)
R_OUT = _align16(R_FF + HIDDEN)            # output_dense weight                   (I, H)
R_TOTAL = _align16(R_OUT + INTER)
W_LANES = 128


def _dft_real_imag(n):
    """Real/imag parts of the (unnormalized) DFT matrix exp(-2*pi*i*j*k/n)."""
    j = np.arange(n)
    ang = 2.0 * np.pi * np.outer(j, j) / n
    return np.cos(ang).astype(np.float32), (-np.sin(ang)).astype(np.float32)


def _block_diag(m, reps):
    n = m.shape[0]
    out = np.zeros((reps * n, reps * n), dtype=m.dtype)
    for r in range(reps):
        out[r * n:(r + 1) * n, r * n:(r + 1) * n] = m
    return out


# ---------------- in-kernel exact-erf GELU ----------------
_ERF_P = 0.3275911
_ERF_A = (0.254829592, -0.284496736, 1.421413741, -1.453152027, 1.061405429)


def _gelu_exact(v):
    """x * 0.5 * (1 + erf(x/sqrt(2))) via A&S 7.1.26 erf (|err| < 1.5e-7).

    Keeps torch.nn.GELU() (exact-erf) semantics without relying on a lax.erf
    lowering inside Mosaic; the exp() maps to the EUP slot.
    """
    a1, a2, a3, a4, a5 = _ERF_A
    z = v * np.float32(1.0 / np.sqrt(2.0))
    az = jnp.abs(z)
    t = 1.0 / (1.0 + _ERF_P * az)
    poly = ((((a5 * t + a4) * t + a3) * t + a2) * t + a1) * t
    erf_abs = 1.0 - poly * jnp.exp(-az * az)
    erf = jnp.where(z < 0, -erf_abs, erf_abs)
    return 0.5 * v * (1.0 + erf)


# ---------------- Pallas kernel ----------------
def fnet_layer_kernel(x_ref, w_ref, aff_ref, o_ref):
    bs, h = x_ref.shape                      # (B*S, H), static Python ints
    f32 = jnp.float32

    x = x_ref[...]                           # f32 (BS, H)

    # bf16 weight slab -> f32 operands (f32 MXU passes; negligible here, keeps
    # activations un-quantized => closer to the torch module's numerics).
    fs = w_ref[R_FS:R_FS + 2 * bs, 0:bs].astype(f32)          # (2BS, BS)
    fh_r = w_ref[R_FH:R_FH + h, 0:h].astype(f32)              # (H, H)
    fh_i = w_ref[R_FH + h:R_FH + 2 * h, 0:h].astype(f32)      # (H, H)
    w_ff = w_ref[R_FF:R_FF + h, 0:INTER].astype(f32)          # (H, I)
    w_o = w_ref[R_OUT:R_OUT + INTER, 0:h].astype(f32)         # (I, H)

    aff = aff_ref[...]                       # (8, 128) f32
    ln1_g, ln1_b = aff[0:1, 0:h], aff[1:2, 0:h]
    ln2_g, ln2_b = aff[2:3, 0:h], aff[3:4, 0:h]
    b_out, b_ff = aff[4:5, 0:h], aff[5:6, 0:INTER]

    # --- Fourier mixing (matmul DFT, real part only) ---
    # Re(Fs @ X @ Fh) = Fs_re @ X @ Fh_re - Fs_im @ X @ Fh_im   (X real)
    a = jnp.dot(fs, x, preferred_element_type=f32)             # (2BS, H)
    fft_out = (jnp.dot(a[0:bs, :], fh_r, preferred_element_type=f32)
               - jnp.dot(a[bs:2 * bs, :], fh_i, preferred_element_type=f32))

    # --- mixing_layer_norm(fft_output + hidden_states) ---
    # var = E[y^2] - mu^2: the two cross-lane reductions are independent.
    y = fft_out + x
    mu = jnp.mean(y, axis=-1, keepdims=True)
    msq = jnp.mean(y * y, axis=-1, keepdims=True)
    var = jnp.maximum(msq - mu * mu, 0.0)
    y = (y - mu) * jax.lax.rsqrt(var + LN_EPS) * ln1_g + ln1_b

    # --- feed_forward + exact-erf GELU ---
    inter = jnp.dot(y, w_ff, preferred_element_type=f32) + b_ff
    inter = _gelu_exact(inter)

    # --- output_dense (+ dropout as identity: eval semantics) ---
    out = jnp.dot(inter, w_o, preferred_element_type=f32) + b_out

    # --- output_layer_norm(output + mixing-LN output) ---
    z = out + y
    mu2 = jnp.mean(z, axis=-1, keepdims=True)
    msq2 = jnp.mean(z * z, axis=-1, keepdims=True)
    var2 = jnp.maximum(msq2 - mu2 * mu2, 0.0)
    o_ref[...] = (z - mu2) * jax.lax.rsqrt(var2 + LN_EPS) * ln2_g + ln2_b


def fnet_layer(x, packed_params):
    """x: (B, S, H) f32.  packed_params = (weight_slab_bf16, affine_slab_f32)."""
    w_slab, aff_slab = packed_params
    B, S, H = x.shape
    x2d = x.reshape(B * S, H)                # contiguous reshape: free in XLA
    out2d = pl.pallas_call(
        fnet_layer_kernel,
        out_shape=jax.ShapeDtypeStruct((B * S, H), jnp.float32),
        # Single gridless invocation: every operand is a full-array VMEM block
        # (< 64 KiB total), so 3 input DMAs + 1 output DMA and no per-grid-step
        # overhead.
        # TODO(synk): if B*S grows (or several layers are fused into one call),
        # add a ("parallel",) grid over token tiles so v7x's second TensorCore
        # is used; at 16 tokens the ~0.35us/step overhead outweighs the win.
        in_specs=[pl.BlockSpec(memory_space=pltpu.MemorySpace.VMEM)] * 3,
        out_specs=pl.BlockSpec(memory_space=pltpu.MemorySpace.VMEM),
    )(x2d, w_slab, aff_slab)
    return out2d.reshape(B, S, H)


def pack_params(fs_re, fs_im, fh_re, fh_im, ln1_g, ln1_b,
                w_ff, b_ff, w_out, b_out, ln2_g, ln2_b, batch):
    """Host-side packing into one bf16 weight slab + one f32 affine slab."""
    S, H, I = fs_re.shape[0], fh_re.shape[0], np.asarray(w_ff).shape[1]
    bs = batch * S

    w_slab = np.zeros((R_TOTAL, W_LANES), np.float32)
    w_slab[R_FS:R_FS + 2 * bs, :bs] = np.concatenate(
        [_block_diag(fs_re, batch), _block_diag(fs_im, batch)], axis=0)
    w_slab[R_FH:R_FH + 2 * H, :H] = np.concatenate([fh_re, fh_im], axis=0)
    w_slab[R_FF:R_FF + H, :I] = np.asarray(w_ff)
    w_slab[R_OUT:R_OUT + I, :H] = np.asarray(w_out)

    aff = np.zeros((8, 128), np.float32)
    aff[0, :H] = np.asarray(ln1_g).reshape(-1)
    aff[1, :H] = np.asarray(ln1_b).reshape(-1)
    aff[2, :H] = np.asarray(ln2_g).reshape(-1)
    aff[3, :H] = np.asarray(ln2_b).reshape(-1)
    aff[4, :H] = np.asarray(b_out).reshape(-1)
    aff[5, :I] = np.asarray(b_ff).reshape(-1)

    return jnp.asarray(w_slab, jnp.bfloat16), jnp.asarray(aff, jnp.float32)


# ---------------- pure-JAX reference (mirrors the PyTorch module) ----------------
def fnet_layer_ref(x, raw):
    (fs_re, fs_im, fh_re, fh_im, ln1_g, ln1_b,
     w_ff, b_ff, w_out, b_out, ln2_g, ln2_b) = raw
    hi = jax.lax.Precision.HIGHEST

    def ln(v, g, b):
        mu = jnp.mean(v, axis=-1, keepdims=True)
        var = jnp.mean(jnp.square(v - mu), axis=-1, keepdims=True)
        return (v - mu) * jax.lax.rsqrt(var + LN_EPS) * g + b

    fft_out = (jnp.einsum('ni,bij,jk->bnk', fs_re, x, fh_re, precision=hi)
               - jnp.einsum('ni,bij,jk->bnk', fs_im, x, fh_im, precision=hi))
    y = ln(fft_out + x, ln1_g, ln1_b)
    inter = jax.nn.gelu(jnp.dot(y, w_ff, precision=hi) + b_ff, approximate=False)
    out = jnp.dot(inter, w_out, precision=hi) + b_out
    return ln(out + y, ln2_g, ln2_b)


if __name__ == "__main__":
    key = jax.random.PRNGKey(0)
    (k_x, k_wff, k_bff, k_wout, k_bout,
     k_g1, k_b1, k_g2, k_b2) = jax.random.split(key, 9)

    x = jax.random.normal(k_x, (BATCH, SEQ, HIDDEN), dtype=jnp.float32)

    fs_re, fs_im = _dft_real_imag(SEQ)
    fh_re, fh_im = _dft_real_imag(HIDDEN)

    w_ff = jax.random.normal(k_wff, (HIDDEN, INTER), jnp.float32) * 0.02
    b_ff = jax.random.normal(k_bff, (1, INTER), jnp.float32) * 0.02
    w_out = jax.random.normal(k_wout, (INTER, HIDDEN), jnp.float32) * 0.02
    b_out = jax.random.normal(k_bout, (1, HIDDEN), jnp.float32) * 0.02
    ln1_g = 1.0 + 0.1 * jax.random.normal(k_g1, (1, HIDDEN), jnp.float32)
    ln1_b = 0.1 * jax.random.normal(k_b1, (1, HIDDEN), jnp.float32)
    ln2_g = 1.0 + 0.1 * jax.random.normal(k_g2, (1, HIDDEN), jnp.float32)
    ln2_b = 0.1 * jax.random.normal(k_b2, (1, HIDDEN), jnp.float32)

    packed = pack_params(fs_re, fs_im, fh_re, fh_im, ln1_g, ln1_b,
                         w_ff, b_ff, w_out, b_out, ln2_g, ln2_b, BATCH)

    # Reference uses the same bf16-rounded weights (upcast to f32): the weight
    # slab is stored bf16, but activations & accumulation stay f32 in-kernel.
    rt = lambda a: jnp.asarray(a, jnp.float32).astype(jnp.bfloat16).astype(jnp.float32)
    raw = (rt(fs_re), rt(fs_im), rt(fh_re), rt(fh_im),
           ln1_g, ln1_b, rt(w_ff), b_ff, rt(w_out), b_out, ln2_g, ln2_b)

    out = jax.block_until_ready(fnet_layer(x, packed))
    ref = jax.block_until_ready(fnet_layer_ref(x, raw))

    np.testing.assert_allclose(np.asarray(out), np.asarray(ref),
                               rtol=2e-2, atol=2e-2)
    print("KERNEL_OK")
</pallas_src>

<mosaic_0001>
module attributes {stable_mosaic.version = 11 : i64} {
  func.func @fnet_layer_kernel(%arg0: memref<16x32xf32, #tpu.memory_space<vmem>>, %arg1: memref<192x128xbf16, #tpu.memory_space<vmem>>, %arg2: memref<8x128xf32, #tpu.memory_space<vmem>>, %arg3: memref<16x32xf32, #tpu.memory_space<vmem>>) attributes {dimension_semantics = [], scalar_prefetch = 0 : i64, scratch_operands = 0 : i64, tpu.core_type = #tpu.core_type<tc>} {
    %c0 = arith.constant 0 : index
    %c0_0 = arith.constant 0 : index
    %0 = vector.load %arg0[%c0, %c0_0] : memref<16x32xf32, #tpu.memory_space<vmem>>, vector<16x32xf32>
    %c0_1 = arith.constant 0 : index
    %c0_2 = arith.constant 0 : index
    %1 = vector.load %arg1[%c0_1, %c0_2] : memref<192x128xbf16, #tpu.memory_space<vmem>>, vector<32x16xbf16>
    %2 = arith.extf %1 : vector<32x16xbf16> to vector<32x16xf32>
    %c32 = arith.constant 32 : index
    %c0_3 = arith.constant 0 : index
    %3 = vector.load %arg1[%c32, %c0_3] : memref<192x128xbf16, #tpu.memory_space<vmem>>, vector<32x32xbf16>
    %4 = arith.extf %3 : vector<32x32xbf16> to vector<32x32xf32>
    %c64 = arith.constant 64 : index
    %c0_4 = arith.constant 0 : index
    %5 = vector.load %arg1[%c64, %c0_4] : memref<192x128xbf16, #tpu.memory_space<vmem>>, vector<32x32xbf16>
    %6 = arith.extf %5 : vector<32x32xbf16> to vector<32x32xf32>
    %c96 = arith.constant 96 : index
    %c0_5 = arith.constant 0 : index
    %7 = vector.load %arg1[%c96, %c0_5] : memref<192x128xbf16, #tpu.memory_space<vmem>>, vector<32x64xbf16>
    %8 = arith.extf %7 : vector<32x64xbf16> to vector<32x64xf32>
    %c128 = arith.constant 128 : index
    %c0_6 = arith.constant 0 : index
    %9 = vector.load %arg1[%c128, %c0_6] : memref<192x128xbf16, #tpu.memory_space<vmem>>, vector<64x32xbf16>
    %10 = arith.extf %9 : vector<64x32xbf16> to vector<64x32xf32>
    %c0_7 = arith.constant 0 : index
    %c0_8 = arith.constant 0 : index
    %11 = vector.load %arg2[%c0_7, %c0_8] : memref<8x128xf32, #tpu.memory_space<vmem>>, vector<8x128xf32>
    %12 = vector.extract_strided_slice %11 {offsets = [0, 0], sizes = [1, 32], strides = [1, 1]} : vector<8x128xf32> to vector<1x32xf32>
    %13 = vector.extract_strided_slice %11 {offsets = [1, 0], sizes = [1, 32], strides = [1, 1]} : vector<8x128xf32> to vector<1x32xf32>
    %14 = vector.extract_strided_slice %11 {offsets = [2, 0], sizes = [1, 32], strides = [1, 1]} : vector<8x128xf32> to vector<1x32xf32>
    %15 = vector.extract_strided_slice %11 {offsets = [3, 0], sizes = [1, 32], strides = [1, 1]} : vector<8x128xf32> to vector<1x32xf32>
    %16 = vector.extract_strided_slice %11 {offsets = [4, 0], sizes = [1, 32], strides = [1, 1]} : vector<8x128xf32> to vector<1x32xf32>
    %17 = vector.extract_strided_slice %11 {offsets = [5, 0], sizes = [1, 64], strides = [1, 1]} : vector<8x128xf32> to vector<1x64xf32>
    %cst = arith.constant dense<0.000000e+00> : vector<32x32xf32>
    %18 = tpu.matmul %2, %0, %cst {dimension_numbers = #tpu.dot_dimension_numbers<[1], [0], [0], [1], [0, 0, 1, 1], [], []>} : vector<32x16xf32>, vector<16x32xf32>, vector<32x32xf32> -> vector<32x32xf32>
    %19 = vector.extract_strided_slice %18 {offsets = [0, 0], sizes = [16, 32], strides = [1, 1]} : vector<32x32xf32> to vector<16x32xf32>
    %cst_9 = arith.constant dense<0.000000e+00> : vector<16x32xf32>
    %20 = tpu.matmul %19, %4, %cst_9 {dimension_numbers = #tpu.dot_dimension_numbers<[1], [0], [0], [1], [0, 0, 1, 1], [], []>} : vector<16x32xf32>, vector<32x32xf32>, vector<16x32xf32> -> vector<16x32xf32>
    %21 = vector.extract_strided_slice %18 {offsets = [16, 0], sizes = [16, 32], strides = [1, 1]} : vector<32x32xf32> to vector<16x32xf32>
    %cst_10 = arith.constant dense<0.000000e+00> : vector<16x32xf32>
    %22 = tpu.matmul %21, %6, %cst_10 {dimension_numbers = #tpu.dot_dimension_numbers<[1], [0], [0], [1], [0, 0, 1, 1], [], []>} : vector<16x32xf32>, vector<32x32xf32>, vector<16x32xf32> -> vector<16x32xf32>
    %23 = arith.subf %20, %22 : vector<16x32xf32>
    %24 = arith.addf %23, %0 : vector<16x32xf32>
    %cst_11 = arith.constant dense<0.000000e+00> : vector<16xf32>
    %25 = vector.multi_reduction <add>, %24, %cst_11 [1] : vector<16x32xf32> to vector<16xf32>
    %26 = vector.shape_cast %25 : vector<16xf32> to vector<16x1xf32>
    %cst_12 = arith.constant 3.200000e+01 : f32
    %27 = vector.broadcast %cst_12 : f32 to vector<16x1xf32>
    %28 = arith.divf %26, %27 : vector<16x1xf32>
    %29 = arith.mulf %24, %24 : vector<16x32xf32>
    %cst_13 = arith.constant dense<0.000000e+00> : vector<16xf32>
    %30 = vector.multi_reduction <add>, %29, %cst_13 [1] : vector<16x32xf32> to vector<16xf32>
    %31 = vector.shape_cast %30 : vector<16xf32> to vector<16x1xf32>
    %cst_14 = arith.constant 3.200000e+01 : f32
    %32 = vector.broadcast %cst_14 : f32 to vector<16x1xf32>
    %33 = arith.divf %31, %32 : vector<16x1xf32>
    %34 = arith.mulf %28, %28 : vector<16x1xf32>
    %35 = arith.subf %33, %34 : vector<16x1xf32>
    %cst_15 = arith.constant 0.000000e+00 : f32
    %36 = vector.broadcast %cst_15 : f32 to vector<16x1xf32>
    %37 = arith.maximumf %35, %36 : vector<16x1xf32>
    %38 = vector.broadcast %28 : vector<16x1xf32> to vector<16x32xf32>
    %39 = arith.subf %24, %38 : vector<16x32xf32>
    %cst_16 = arith.constant 9.99999996E-13 : f32
    %40 = vector.broadcast %cst_16 : f32 to vector<16x1xf32>
    %41 = arith.addf %37, %40 : vector<16x1xf32>
    %42 = math.rsqrt %41 : vector<16x1xf32>
    %43 = vector.broadcast %42 : vector<16x1xf32> to vector<16x32xf32>
    %44 = arith.mulf %39, %43 : vector<16x32xf32>
    %45 = vector.broadcast %12 : vector<1x32xf32> to vector<16x32xf32>
    %46 = arith.mulf %44, %45 : vector<16x32xf32>
    %47 = vector.broadcast %13 : vector<1x32xf32> to vector<16x32xf32>
    %48 = arith.addf %46, %47 : vector<16x32xf32>
    %cst_17 = arith.constant dense<0.000000e+00> : vector<16x64xf32>
    %49 = tpu.matmul %48, %8, %cst_17 {dimension_numbers = #tpu.dot_dimension_numbers<[1], [0], [0], [1], [0, 0, 1, 1], [], []>} : vector<16x32xf32>, vector<32x64xf32>, vector<16x64xf32> -> vector<16x64xf32>
    %50 = vector.broadcast %17 : vector<1x64xf32> to vector<16x64xf32>
    %51 = arith.addf %49, %50 : vector<16x64xf32>
    %cst_18 = arith.constant 0.707106769 : f32
    %52 = vector.broadcast %cst_18 : f32 to vector<16x64xf32>
    %53 = arith.mulf %51, %52 : vector<16x64xf32>
    %54 = math.absf %53 : vector<16x64xf32>
    %cst_19 = arith.constant 0.327591091 : f32
    %55 = vector.broadcast %cst_19 : f32 to vector<16x64xf32>
    %56 = arith.mulf %55, %54 : vector<16x64xf32>
    %cst_20 = arith.constant 1.000000e+00 : f32
    %57 = vector.broadcast %cst_20 : f32 to vector<16x64xf32>
    %58 = arith.addf %57, %56 : vector<16x64xf32>
    %cst_21 = arith.constant 1.000000e+00 : f32
    %59 = vector.broadcast %cst_21 : f32 to vector<16x64xf32>
    %60 = arith.divf %59, %58 : vector<16x64xf32>
    %cst_22 = arith.constant 1.06140542 : f32
    %61 = vector.broadcast %cst_22 : f32 to vector<16x64xf32>
    %62 = arith.mulf %61, %60 : vector<16x64xf32>
    %cst_23 = arith.constant -1.45315206 : f32
    %63 = vector.broadcast %cst_23 : f32 to vector<16x64xf32>
    %64 = arith.addf %62, %63 : vector<16x64xf32>
    %65 = arith.mulf %64, %60 : vector<16x64xf32>
    %cst_24 = arith.constant 1.42141378 : f32
    %66 = vector.broadcast %cst_24 : f32 to vector<16x64xf32>
    %67 = arith.addf %65, %66 : vector<16x64xf32>
    %68 = arith.mulf %67, %60 : vector<16x64xf32>
    %cst_25 = arith.constant -0.284496725 : f32
    %69 = vector.broadcast %cst_25 : f32 to vector<16x64xf32>
    %70 = arith.addf %68, %69 : vector<16x64xf32>
    %71 = arith.mulf %70, %60 : vector<16x64xf32>
    %cst_26 = arith.constant 0.254829586 : f32
    %72 = vector.broadcast %cst_26 : f32 to vector<16x64xf32>
    %73 = arith.addf %71, %72 : vector<16x64xf32>
    %74 = arith.mulf %73, %60 : vector<16x64xf32>
    %cst_27 = arith.constant 0.000000e+00 : f32
    %75 = vector.broadcast %cst_27 : f32 to vector<16x64xf32>
    %76 = arith.subf %75, %54 : vector<16x64xf32>
    %77 = arith.mulf %76, %54 : vector<16x64xf32>
    %78 = math.exp %77 : vector<16x64xf32>
    %79 = arith.mulf %74, %78 : vector<16x64xf32>
    %cst_28 = arith.constant 1.000000e+00 : f32
    %80 = vector.broadcast %cst_28 : f32 to vector<16x64xf32>
    %81 = arith.subf %80, %79 : vector<16x64xf32>
    %cst_29 = arith.constant 0.000000e+00 : f32
    %82 = vector.broadcast %cst_29 : f32 to vector<16x64xf32>
    %83 = arith.cmpf olt, %53, %82 : vector<16x64xf32>
    %cst_30 = arith.constant 0.000000e+00 : f32
    %84 = vector.broadcast %cst_30 : f32 to vector<16x64xf32>
    %85 = arith.subf %84, %81 : vector<16x64xf32>
    %86 = arith.select %83, %85, %81 : vector<16x64xi1>, vector<16x64xf32>
    %cst_31 = arith.constant 5.000000e-01 : f32
    %87 = vector.broadcast %cst_31 : f32 to vector<16x64xf32>
    %88 = arith.mulf %87, %51 : vector<16x64xf32>
    %cst_32 = arith.constant 1.000000e+00 : f32
    %89 = vector.broadcast %cst_32 : f32 to vector<16x64xf32>
    %90 = arith.addf %89, %86 : vector<16x64xf32>
    %91 = arith.mulf %88, %90 : vector<16x64xf32>
    %cst_33 = arith.constant dense<0.000000e+00> : vector<16x32xf32>
    %92 = tpu.matmul %91, %10, %cst_33 {dimension_numbers = #tpu.dot_dimension_numbers<[1], [0], [0], [1], [0, 0, 1, 1], [], []>} : vector<16x64xf32>, vector<64x32xf32>, vector<16x32xf32> -> vector<16x32xf32>
    %93 = vector.broadcast %16 : vector<1x32xf32> to vector<16x32xf32>
    %94 = arith.addf %92, %93 : vector<16x32xf32>
    %95 = arith.addf %94, %48 : vector<16x32xf32>
    %cst_34 = arith.constant dense<0.000000e+00> : vector<16xf32>
    %96 = vector.multi_reduction <add>, %95, %cst_34 [1] : vector<16x32xf32> to vector<16xf32>
    %97 = vector.shape_cast %96 : vector<16xf32> to vector<16x1xf32>
    %cst_35 = arith.constant 3.200000e+01 : f32
    %98 = vector.broadcast %cst_35 : f32 to vector<16x1xf32>
    %99 = arith.divf %97, %98 : vector<16x1xf32>
    %100 = arith.mulf %95, %95 : vector<16x32xf32>
    %cst_36 = arith.constant dense<0.000000e+00> : vector<16xf32>
    %101 = vector.multi_reduction <add>, %100, %cst_36 [1] : vector<16x32xf32> to vector<16xf32>
    %102 = vector.shape_cast %101 : vector<16xf32> to vector<16x1xf32>
    %cst_37 = arith.constant 3.200000e+01 : f32
    %103 = vector.broadcast %cst_37 : f32 to vector<16x1xf32>
    %104 = arith.divf %102, %103 : vector<16x1xf32>
    %105 = arith.mulf %99, %99 : vector<16x1xf32>
    %106 = arith.subf %104, %105 : vector<16x1xf32>
    %cst_38 = arith.constant 0.000000e+00 : f32
    %107 = vector.broadcast %cst_38 : f32 to vector<16x1xf32>
    %108 = arith.maximumf %106, %107 : vector<16x1xf32>
    %109 = vector.broadcast %99 : vector<16x1xf32> to vector<16x32xf32>
    %110 = arith.subf %95, %109 : vector<16x32xf32>
    %cst_39 = arith.constant 9.99999996E-13 : f32
    %111 = vector.broadcast %cst_39 : f32 to vector<16x1xf32>
    %112 = arith.addf %108, %111 : vector<16x1xf32>
    %113 = math.rsqrt %112 : vector<16x1xf32>
    %114 = vector.broadcast %113 : vector<16x1xf32> to vector<16x32xf32>
    %115 = arith.mulf %110, %114 : vector<16x32xf32>
    %116 = vector.broadcast %14 : vector<1x32xf32> to vector<16x32xf32>
    %117 = arith.mulf %115, %116 : vector<16x32xf32>
    %118 = vector.broadcast %15 : vector<1x32xf32> to vector<16x32xf32>
    %119 = arith.addf %117, %118 : vector<16x32xf32>
    %c0_40 = arith.constant 0 : index
    %c0_41 = arith.constant 0 : index
    %120 = vector.load %arg3[%c0_40, %c0_41] : memref<16x32xf32, #tpu.memory_space<vmem>>, vector<16x32xf32>
    tpu.vector_store %arg3[%c0_40, %c0_41], %119 {strides = array<i32>} : memref<16x32xf32, #tpu.memory_space<vmem>>, vector<16x32xf32>,
    return
  }
}

</mosaic_0001>

<llo_original>
// kernel: tpu_custom_call.1
$region0: #{tpu_custom_call.1}
  #allocation0 [shape = 'u32[]', space=smem, size = 0x4, offset = 0x4, fixed_abs, tag = 'smem constant byte address 0x4 - core index']
  #allocation1 [shape = 'u32[144,128]{1,0:T(1,128)}', space=vmem, size = 0x12000, scoped, tag = 'internal scratch']
  %s0 = inlined_call_operand.hbm [shape: f32[16,32], index: 0, kind: input, shape index: {}]
  %s1 = inlined_call_operand.hbm [shape: bf16[192,128], index: 1, kind: input, shape index: {}]
  %s2 = inlined_call_operand.hbm [shape: f32[8,128], index: 2, kind: input, shape index: {}]
  %s3 = inlined_call_operand.hbm [shape: f32[16,32], index: 3, kind: output, shape index: {}]
  %s4 = sld [smem:[#allocation0]]
  $region34: #{tpu_custom_call.1} parent=0
    _
  %s6 = ssub.s32 1, %s4
  %s7 = scalar_select 0, %s6, %s4
  $region1: #{tpu_custom_call.1} parent=0
    #allocation2 [shape = 'u8[8192]{0}', space=vmem, size = 0x2000, scoped, tag = 'input window, operand 0, single buffered']
    #allocation3 [shape = 's32[1]{0}', space=sflag, size = 0x4, scoped, tag = 'scoped memory for tpu_custom_call.1']
    #allocation4 [shape = 's32[1]{0}', space=sflag, size = 0x4, scoped, tag = 'scoped memory for tpu_custom_call.1']
    #allocation5 [shape = 'u8[49152]{0}', space=vmem, size = 0xc000, scoped, tag = 'input window, operand 1, single buffered']
    #allocation6 [shape = 's32[1]{0}', space=sflag, size = 0x4, scoped, tag = 'scoped memory for tpu_custom_call.1']
    #allocation7 [shape = 'u8[4096]{0}', space=vmem, size = 0x1000, scoped, tag = 'input window, operand 2, single buffered']
    #allocation8 [shape = 'u8[8192]{0}', space=vmem, size = 0x2000, scoped, tag = 'output window, operand 0, single buffered']
    %8 = vsyncpa [#allocation3], 0
    %9 = vsyncpa [#allocation6], 0
    %10 = vsyncpa [#allocation4], 0
    // Predicated region
    $region2: #{tpu_custom_call.1} parent=1 // pred_check
      _
    $region3: #{tpu_custom_call.1} parent=1 // pred_check_branch
      %12 = sbr.rel (0) target = $region5
    $region4: #{tpu_custom_call.1} parent=1 // pred_region
      %s14 = ssub.s32 256, 256
      %15 = vsyncadd [#allocation3], %s14
      %s16 = sshll.u32 [#allocation2], 4
      %s17 = int_to_ptr.vmem [resolvable:$true] %s16
      %22 = dma.hbm_to_vmem [thread:$0]  %s0, 256, %s17, [#allocation3], 128, 128, 8
    $region5: #{tpu_custom_call.1} parent=1 // pred_fallthru
      _
    // Predicated region
    $region6: #{tpu_custom_call.1} parent=1 // pred_check
      _
    $region7: #{tpu_custom_call.1} parent=1 // pred_check_branch
      %24 = sbr.rel (0) target = $region9
    $region8: #{tpu_custom_call.1} parent=1 // pred_region
      %s26 = ssub.s32 1536, 1536
      %27 = vsyncadd [#allocation6], %s26
      %s28 = sshll.u32 [#allocation5], 4
      %s29 = int_to_ptr.vmem [resolvable:$true] %s28
      %34 = dma.hbm_to_vmem [thread:$0]  %s1, 1536, %s29, [#allocation6], 64, 64, 4
    $region9: #{tpu_custom_call.1} parent=1 // pred_fallthru
      _
    // Predicated region
    $region10: #{tpu_custom_call.1} parent=1 // pred_check
      _
    $region11: #{tpu_custom_call.1} parent=1 // pred_check_branch
      %36 = sbr.rel (0) target = $region13
    $region12: #{tpu_custom_call.1} parent=1 // pred_region
      %s38 = ssub.s32 128, 128
      %39 = vsyncadd [#allocation6], %s38
      %s41 = sshll.u32 [#allocation7], 4
      %s42 = int_to_ptr.vmem [resolvable:$true] %s41
      %44 = dma.hbm_to_vmem [thread:$0]  %s2, 128, %s42, [#allocation6]
    $region13: #{tpu_custom_call.1} parent=1 // pred_fallthru
      _
    // Predicated region
    $region14: #{tpu_custom_call.1} parent=1 // pred_check
      _
    $region15: #{tpu_custom_call.1} parent=1 // pred_check_branch
      %46 = sbr.rel (0) target = $region17
    $region16: #{tpu_custom_call.1} parent=1 // pred_region
      %47 = dma.done [#allocation3], 256
    $region17: #{tpu_custom_call.1} parent=1 // pred_fallthru
      _
    // Predicated region
    $region18: #{tpu_custom_call.1} parent=1 // pred_check
      _
    $region19: #{tpu_custom_call.1} parent=1 // pred_check_branch
      %49 = sbr.rel (0) target = $region21
    $region20: #{tpu_custom_call.1} parent=1 // pred_region
      %50 = dma.done [#allocation6], 1536
    $region21: #{tpu_custom_call.1} parent=1 // pred_fallthru
      _
    // Predicated region
    $region22: #{tpu_custom_call.1} parent=1 // pred_check
      _
    $region23: #{tpu_custom_call.1} parent=1 // pred_check_branch
      %52 = sbr.rel (0) target = $region25
    $region24: #{tpu_custom_call.1} parent=1 // pred_region
      %53 = dma.done [#allocation6], 128
    $region25: #{tpu_custom_call.1} parent=1 // pred_fallthru
      _
    %v54 = vld [vmem:[#allocation2] sm:$0xff]
    %v55 = vld [vmem:[#allocation2 + $0x8] sm:$0xff]
    %v56 = vld [vmem:[#allocation5] sm:$0xf]
    %v57 = vld [vmem:[#allocation5 + $0x4] sm:$0xf]
    %v58 = vld [vmem:[#allocation5 + $0x8] sm:$0xf]
    %v59 = vld [vmem:[#allocation5 + $0xc] sm:$0xf]
    %v60 = vunpack.c.l.bf16 %v56
    %v61 = vunpack.c.l.bf16 %v57
    %v62 = vunpack.c.l.bf16 %v58
    %v63 = vunpack.c.l.bf16 %v59
    %v64 = vld [vmem:[#allocation5 + $0x10] sm:$0xf]
    %v65 = vld [vmem:[#allocation5 + $0x14] sm:$0xf]
    %v66 = vld [vmem:[#allocation5 + $0x18] sm:$0xf]
    %v67 = vld [vmem:[#allocation5 + $0x1c] sm:$0xf]
    %v68 = vunpack.c.l.bf16 %v64
    %v69 = vunpack.c.l.bf16 %v65
    %v70 = vunpack.c.l.bf16 %v66
    %v71 = vunpack.c.l.bf16 %v67
    %v72 = vld [vmem:[#allocation5 + $0x20] sm:$0xf]
    %v73 = vld [vmem:[#allocation5 + $0x24] sm:$0xf]
    %v74 = vld [vmem:[#allocation5 + $0x28] sm:$0xf]
    %v75 = vld [vmem:[#allocation5 + $0x2c] sm:$0xf]
    %v76 = vunpack.c.l.bf16 %v72
    %v77 = vunpack.c.l.bf16 %v73
    %v78 = vunpack.c.l.bf16 %v74
    %v79 = vunpack.c.l.bf16 %v75
    %v80 = vld [vmem:[#allocation5 + $0x30] sm:$0xf]
    %v81 = vld [vmem:[#allocation5 + $0x34] sm:$0xf]
    %v82 = vld [vmem:[#allocation5 + $0x38] sm:$0xf]
    %v83 = vld [vmem:[#allocation5 + $0x3c] sm:$0xf]
    %v84 = vunpack.c.l.bf16 %v80
    %v85 = vunpack.c.l.bf16 %v81
    %v86 = vunpack.c.l.bf16 %v82
    %v87 = vunpack.c.l.bf16 %v83
    %v88 = vld [vmem:[#allocation5 + $0x40] sm:$0xf]
    %v89 = vld [vmem:[#allocation5 + $0x44] sm:$0xf]
    %v90 = vld [vmem:[#allocation5 + $0x48] sm:$0xf]
    %v91 = vld [vmem:[#allocation5 + $0x4c] sm:$0xf]
    %v92 = vld [vmem:[#allocation5 + $0x50] sm:$0xf]
    %v93 = vld [vmem:[#allocation5 + $0x54] sm:$0xf]
    %v94 = vld [vmem:[#allocation5 + $0x58] sm:$0xf]
    %v95 = vld [vmem:[#allocation5 + $0x5c] sm:$0xf]
    %v96 = vunpack.c.l.bf16 %v88
    %v97 = vunpack.c.l.bf16 %v89
    %v98 = vunpack.c.l.bf16 %v90
    %v99 = vunpack.c.l.bf16 %v91
    %v100 = vunpack.c.l.bf16 %v92
    %v101 = vunpack.c.l.bf16 %v93
    %v102 = vunpack.c.l.bf16 %v94
    %v103 = vunpack.c.l.bf16 %v95
    %v104 = vld [vmem:[#allocation7] sm:$0xff]
    %vm105 = vcmask 130048
    %v107 = vsel %vm105, %v60, 0
    %v110 = vsel %vm105, %v61, 0
    %v113 = vsel %vm105, %v62, 0
    %v116 = vsel %vm105, %v63, 0
    %118 = vmatprep.subr.mxu0 0.0
    %119 = vmatpush1.msra.mxu0 0.0
    %120 = vmatprep.subr.mxu0 0.0
    %121 = vmatpush1.msra.mxu0 0.0
    %122 = vmatprep.subr.mxu0 0.0
    %123 = vmatpush1.msra.mxu0 0.0
    %124 = vmatprep.subr.mxu0 0.0
    %125 = vmatpush1.msra.mxu0 0.0
    %126 = vmatprep.subr.mxu0 0.0
    %127 = vmatpush1.msra.mxu0 0.0
    %128 = vmatprep.subr.mxu0 0.0
    %129 = vmatpush1.msra.mxu0 0.0
    %130 = vmatprep.subr.mxu0 0.0
    %131 = vmatpush1.msra.mxu0 0.0
    %132 = vmatprep.subr.mxu0 0.0
    %133 = vmatpush1.msra.mxu0 0.0
    %134 = vmatprep.subr.mxu0 0.0
    %135 = vmatpush1.msra.mxu0 0.0
    %136 = vmatprep.subr.mxu0 0.0
    %137 = vmatpush1.msra.mxu0 0.0
    %138 = vmatprep.subr.mxu0 0.0
    %139 = vmatpush1.msra.mxu0 0.0
    %140 = vmatprep.subr.mxu0 0.0
    %141 = vmatpush1.msra.mxu0 0.0
    %142 = vmatprep.subr.mxu0 0.0
    %143 = vmatpush1.msra.mxu0 0.0
    %144 = vmatprep.subr.mxu0 0.0
    %145 = vmatpush1.msra.mxu0 0.0
    %146 = vmatprep.subr.mxu0 0.0
    %147 = vmatpush1.msra.mxu0 %v55
    %148 = vmatprep.subr.mxu0 0.0
    %149 = vmatpush1.msra.mxu0 %v54
    %150 = vmatprep.subr.mxu0 0.0
    %151 = vmatpush2.msra.mxu0 0.0
    %152 = vmatprep.subr.mxu0 0.0
    %153 = vmatpush2.msra.mxu0 0.0
    %154 = vmatprep.subr.mxu0 0.0
    %155 = vmatpush2.msra.mxu0 0.0
    %156 = vmatprep.subr.mxu0 0.0
    %157 = vmatpush2.msra.mxu0 0.0
    %158 = vmatprep.subr.mxu0 0.0
    %159 = vmatpush2.msra.mxu0 0.0
    %160 = vmatprep.subr.mxu0 0.0
    %161 = vmatpush2.msra.mxu0 0.0
    %162 = vmatprep.subr.mxu0 0.0
    %163 = vmatpush2.msra.mxu0 0.0
    %164 = vmatprep.subr.mxu0 0.0
    %165 = vmatpush2.msra.mxu0 0.0
    %166 = vmatprep.subr.mxu0 0.0
    %167 = vmatpush2.msra.mxu0 0.0
    %168 = vmatprep.subr.mxu0 0.0
    %169 = vmatpush2.msra.mxu0 0.0
    %170 = vmatprep.subr.mxu0 0.0
    %171 = vmatpush2.msra.mxu0 0.0
    %172 = vmatprep.subr.mxu0 0.0
    %173 = vmatpush2.msra.mxu0 0.0
    %174 = vmatprep.subr.mxu0 0.0
    %175 = vmatpush2.msra.mxu0 0.0
    %176 = vmatprep.subr.mxu0 0.0
    %177 = vmatpush2.msra.mxu0 0.0
    %178 = vmatprep.subr.mxu0 0.0
    %179 = vmatpush2.msra.mxu0 0.0
    %180 = vmatprep.subr.mxu0 0.0
    %181 = vmatpush2.msra.mxu0 0.0
    %182 = vmatprep.mubr.f32.mxu0 0.0
    %183 = vmatmul.mubr.f32.gmra.mxu0 %v107
    %v184 = vpop.f32.mrf.mxu0
    %v185 = vadd.f32 0.0, %v184
    %v186 = vpop.f32.mrf.mxu0
    %187 = vmatprep.mubr.f32.mxu0 0.0
    %188 = vmatmul.mubr.f32.gmra.mxu0 %v110
    %v189 = vpop.f32.mrf.mxu0
    %v190 = vadd.f32 0.0, %v189
    %v191 = vpop.f32.mrf.mxu0
    %192 = vmatprep.mubr.f32.mxu0 0.0
    %193 = vmatmul.mubr.f32.gmra.mxu0 %v113
    %v194 = vpop.f32.mrf.mxu0
    %v195 = vadd.f32 0.0, %v194
    %v196 = vpop.f32.mrf.mxu0
    %197 = vmatprep.mubr.f32.mxu0 0.0
    %198 = vmatmul.mubr.f32.gmra.mxu0 %v116
    %v199 = vpop.f32.mrf.mxu0
    %v200 = vadd.f32 0.0, %v199
    %v201 = vpop.f32.mrf.mxu0
    %202 = vdwg.mxu0
    %vm203 = vcmask 261120
    %v205 = vsel %vm203, %v185, 0
    %v208 = vsel %vm203, %v190, 0
    %210 = vmatprep.subr.mxu0 0.0
    %211 = vmatpush1.msra.mxu0 0.0
    %212 = vmatprep.subr.mxu0 0.0
    %213 = vmatpush1.msra.mxu0 0.0
    %214 = vmatprep.subr.mxu0 0.0
    %215 = vmatpush1.msra.mxu0 0.0
    %216 = vmatprep.subr.mxu0 0.0
    %217 = vmatpush1.msra.mxu0 0.0
    %218 = vmatprep.subr.mxu0 0.0
    %219 = vmatpush1.msra.mxu0 0.0
    %220 = vmatprep.subr.mxu0 0.0
    %221 = vmatpush1.msra.mxu0 0.0
    %222 = vmatprep.subr.mxu0 0.0
    %223 = vmatpush1.msra.mxu0 0.0
    %224 = vmatprep.subr.mxu0 0.0
    %225 = vmatpush1.msra.mxu0 0.0
    %226 = vmatprep.subr.mxu0 0.0
    %227 = vmatpush1.msra.mxu0 0.0
    %228 = vmatprep.subr.mxu0 0.0
    %229 = vmatpush1.msra.mxu0 0.0
    %230 = vmatprep.subr.mxu0 0.0
    %231 = vmatpush1.msra.mxu0 0.0
    %232 = vmatprep.subr.mxu0 0.0
    %233 = vmatpush1.msra.mxu0 0.0
    %234 = vmatprep.subr.mxu0 0.0
    %235 = vmatpush1.msra.mxu0 %v71
    %236 = vmatprep.subr.mxu0 0.0
    %237 = vmatpush1.msra.mxu0 %v70
    %238 = vmatprep.subr.mxu0 0.0
    %239 = vmatpush1.msra.mxu0 %v69
    %240 = vmatprep.subr.mxu0 0.0
    %241 = vmatpush1.msra.mxu0 %v68
    %242 = vmatprep.subr.mxu0 0.0
    %243 = vmatpush2.msra.mxu0 0.0
    %244 = vmatprep.subr.mxu0 0.0
    %245 = vmatpush2.msra.mxu0 0.0
    %246 = vmatprep.subr.mxu0 0.0
    %247 = vmatpush2.msra.mxu0 0.0
    %248 = vmatprep.subr.mxu0 0.0
    %249 = vmatpush2.msra.mxu0 0.0
    %250 = vmatprep.subr.mxu0 0.0
    %251 = vmatpush2.msra.mxu0 0.0
    %252 = vmatprep.subr.mxu0 0.0
    %253 = vmatpush2.msra.mxu0 0.0
    %254 = vmatprep.subr.mxu0 0.0
    %255 = vmatpush2.msra.mxu0 0.0
    %256 = vmatprep.subr.mxu0 0.0
    %257 = vmatpush2.msra.mxu0 0.0
    %258 = vmatprep.subr.mxu0 0.0
    %259 = vmatpush2.msra.mxu0 0.0
    %260 = vmatprep.subr.mxu0 0.0
    %261 = vmatpush2.msra.mxu0 0.0
    %262 = vmatprep.subr.mxu0 0.0
    %263 = vmatpush2.msra.mxu0 0.0
    %264 = vmatprep.subr.mxu0 0.0
    %265 = vmatpush2.msra.mxu0 0.0
    %266 = vmatprep.subr.mxu0 0.0
    %267 = vmatpush2.msra.mxu0 0.0
    %268 = vmatprep.subr.mxu0 0.0
    %269 = vmatpush2.msra.mxu0 0.0
    %270 = vmatprep.subr.mxu0 0.0
    %271 = vmatpush2.msra.mxu0 0.0
    %272 = vmatprep.subr.mxu0 0.0
    %273 = vmatpush2.msra.mxu0 0.0
    %274 = vmatprep.mubr.f32.mxu0 0.0
    %275 = vmatmul.mubr.f32.gmra.mxu0 %v205
    %v276 = vpop.f32.mrf.mxu0
    %v277 = vadd.f32 0.0, %v276
    %v278 = vpop.f32.mrf.mxu0
    %279 = vmatprep.mubr.f32.mxu0 0.0
    %280 = vmatmul.mubr.f32.gmra.mxu0 %v208
    %v281 = vpop.f32.mrf.mxu0
    %v282 = vadd.f32 0.0, %v281
    %v283 = vpop.f32.mrf.mxu0
    %284 = vdwg.mxu0
    %v286 = vsel %vm203, %v195, 0
    %v289 = vsel %vm203, %v200, 0
    %291 = vmatprep.subr.mxu0 0.0
    %292 = vmatpush1.msra.mxu0 0.0
    %293 = vmatprep.subr.mxu0 0.0
    %294 = vmatpush1.msra.mxu0 0.0
    %295 = vmatprep.subr.mxu0 0.0
    %296 = vmatpush1.msra.mxu0 0.0
    %297 = vmatprep.subr.mxu0 0.0
    %298 = vmatpush1.msra.mxu0 0.0
    %299 = vmatprep.subr.mxu0 0.0
    %300 = vmatpush1.msra.mxu0 0.0
    %301 = vmatprep.subr.mxu0 0.0
    %302 = vmatpush1.msra.mxu0 0.0
    %303 = vmatprep.subr.mxu0 0.0
    %304 = vmatpush1.msra.mxu0 0.0
    %305 = vmatprep.subr.mxu0 0.0
    %306 = vmatpush1.msra.mxu0 0.0
    %307 = vmatprep.subr.mxu0 0.0
    %308 = vmatpush1.msra.mxu0 0.0
    %309 = vmatprep.subr.mxu0 0.0
    %310 = vmatpush1.msra.mxu0 0.0
    %311 = vmatprep.subr.mxu0 0.0
    %312 = vmatpush1.msra.mxu0 0.0
    %313 = vmatprep.subr.mxu0 0.0
    %314 = vmatpush1.msra.mxu0 0.0
    %315 = vmatprep.subr.mxu0 0.0
    %316 = vmatpush1.msra.mxu0 %v79
    %317 = vmatprep.subr.mxu0 0.0
    %318 = vmatpush1.msra.mxu0 %v78
    %319 = vmatprep.subr.mxu0 0.0
    %320 = vmatpush1.msra.mxu0 %v77
    %321 = vmatprep.subr.mxu0 0.0
    %322 = vmatpush1.msra.mxu0 %v76
    %323 = vmatprep.subr.mxu0 0.0
    %324 = vmatpush2.msra.mxu0 0.0
    %325 = vmatprep.subr.mxu0 0.0
    %326 = vmatpush2.msra.mxu0 0.0
    %327 = vmatprep.subr.mxu0 0.0
    %328 = vmatpush2.msra.mxu0 0.0
    %329 = vmatprep.subr.mxu0 0.0
    %330 = vmatpush2.msra.mxu0 0.0
    %331 = vmatprep.subr.mxu0 0.0
    %332 = vmatpush2.msra.mxu0 0.0
    %333 = vmatprep.subr.mxu0 0.0
    %334 = vmatpush2.msra.mxu0 0.0
    %335 = vmatprep.subr.mxu0 0.0
    %336 = vmatpush2.msra.mxu0 0.0
    %337 = vmatprep.subr.mxu0 0.0
    %338 = vmatpush2.msra.mxu0 0.0
    %339 = vmatprep.subr.mxu0 0.0
    %340 = vmatpush2.msra.mxu0 0.0
    %341 = vmatprep.subr.mxu0 0.0
    %342 = vmatpush2.msra.mxu0 0.0
    %343 = vmatprep.subr.mxu0 0.0
    %344 = vmatpush2.msra.mxu0 0.0
    %345 = vmatprep.subr.mxu0 0.0
    %346 = vmatpush2.msra.mxu0 0.0
    %347 = vmatprep.subr.mxu0 0.0
    %348 = vmatpush2.msra.mxu0 0.0
    %349 = vmatprep.subr.mxu0 0.0
    %350 = vmatpush2.msra.mxu0 0.0
    %351 = vmatprep.subr.mxu0 0.0
    %352 = vmatpush2.msra.mxu0 0.0
    %353 = vmatprep.subr.mxu0 0.0
    %354 = vmatpush2.msra.mxu0 0.0
    %355 = vmatprep.mubr.f32.mxu0 0.0
    %356 = vmatmul.mubr.f32.gmra.mxu0 %v286
    %v357 = vpop.f32.mrf.mxu0
    %v358 = vadd.f32 0.0, %v357
    %v359 = vpop.f32.mrf.mxu0
    %360 = vmatprep.mubr.f32.mxu0 0.0
    %361 = vmatmul.mubr.f32.gmra.mxu0 %v289
    %v362 = vpop.f32.mrf.mxu0
    %v363 = vadd.f32 0.0, %v362
    %v364 = vpop.f32.mrf.mxu0
    %365 = vdwg.mxu0
    %v366 = vsub.f32 %v277, %v358
    %v367 = vsub.f32 %v282, %v363
    %v368 = vadd.f32 %v366, %v54
    %v369 = vadd.f32 %v367, %v55
    %v370 = vsel %vm203, %v368, 0.0
    %371 = vadd.xlane.f32.xlu0 %v370
    %v372 = vpop.xlane.xlu0 %371
    %v373 = vsel %vm203, %v369, 0.0
    %374 = vadd.xlane.f32.xlu0 %v373
    %v375 = vpop.xlane.xlu0 %374
    %v376 = vrcp.pop 32.0
    %v377 = vmul.f32 %v372, %v376
    %v378 = vmul.f32 %v375, %v376
    %v379 = vmul.f32 %v368, %v368
    %v380 = vmul.f32 %v369, %v369
    %v381 = vsel %vm203, %v379, 0.0
    %382 = vadd.xlane.f32.xlu0 %v381
    %v383 = vpop.xlane.xlu0 %382
    %v384 = vsel %vm203, %v380, 0.0
    %385 = vadd.xlane.f32.xlu0 %v384
    %v386 = vpop.xlane.xlu0 %385
    %v387 = vmul.f32 %v383, %v376
    %v388 = vmul.f32 %v386, %v376
    %v389 = vmul.f32 %v377, %v377
    %v390 = vmul.f32 %v378, %v378
    %v391 = vsub.f32 %v387, %v389
    %v392 = vsub.f32 %v388, %v390
    %v393 = vmax.f32 %v391, 0.0
    %v394 = vmax.f32 %v392, 0.0
    %v395 = vsub.f32 %v368, %v377
    %v396 = vsub.f32 %v369, %v378
    %v397 = vadd.f32 %v393, 1e-12
    %v398 = vadd.f32 %v394, 1e-12
    %v399 = vrsqrt.pop %v397
    %v400 = vrsqrt.pop %v398
    %v401 = vmul.f32 %v395, %v399
    %v402 = vmul.f32 %v396, %v400
    %v403 = vlaneseq
    %v404 = vshrl.u32 %v403, 7
    %v405 = vsub.s32 0, %v404
    %v406 = vrot.slane %v104, %v405
    %v407 = vmul.f32 %v401, %v406
    %v408 = vmul.f32 %v402, %v406
    %v409 = vlaneseq
    %v410 = vshrl.u32 %v409, 7
    %v411 = vsub.s32 1, %v410
    %v412 = vrot.slane %v104, %v411
    %v413 = vadd.f32 %v407, %v412
    %v414 = vadd.f32 %v408, %v412
    %v415 = vlaneseq
    %v416 = vshrl.u32 %v415, 7
    %v417 = vsub.s32 5, %v416
    %v418 = vrot.slane %v104, %v417
    %v420 = vsel %vm203, %v413, 0
    %v423 = vsel %vm203, %v414, 0
    %425 = vmatprep.subr.mxu0 0.0
    %426 = vmatpush1.msra.mxu0 0.0
    %427 = vmatprep.subr.mxu0 0.0
    %428 = vmatpush1.msra.mxu0 0.0
    %429 = vmatprep.subr.mxu0 0.0
    %430 = vmatpush1.msra.mxu0 0.0
    %431 = vmatprep.subr.mxu0 0.0
    %432 = vmatpush1.msra.mxu0 0.0
    %433 = vmatprep.subr.mxu0 0.0
    %434 = vmatpush1.msra.mxu0 0.0
    %435 = vmatprep.subr.mxu0 0.0
    %436 = vmatpush1.msra.mxu0 0.0
    %437 = vmatprep.subr.mxu0 0.0
    %438 = vmatpush1.msra.mxu0 0.0
    %439 = vmatprep.subr.mxu0 0.0
    %440 = vmatpush1.msra.mxu0 0.0
    %441 = vmatprep.subr.mxu0 0.0
    %442 = vmatpush1.msra.mxu0 0.0
    %443 = vmatprep.subr.mxu0 0.0
    %444 = vmatpush1.msra.mxu0 0.0
    %445 = vmatprep.subr.mxu0 0.0
    %446 = vmatpush1.msra.mxu0 0.0
    %447 = vmatprep.subr.mxu0 0.0
    %448 = vmatpush1.msra.mxu0 0.0
    %449 = vmatprep.subr.mxu0 0.0
    %450 = vmatpush1.msra.mxu0 %v87
    %451 = vmatprep.subr.mxu0 0.0
    %452 = vmatpush1.msra.mxu0 %v86
    %453 = vmatprep.subr.mxu0 0.0
    %454 = vmatpush1.msra.mxu0 %v85
    %455 = vmatprep.subr.mxu0 0.0
    %456 = vmatpush1.msra.mxu0 %v84
    %457 = vmatprep.subr.mxu0 0.0
    %458 = vmatpush2.msra.mxu0 0.0
    %459 = vmatprep.subr.mxu0 0.0
    %460 = vmatpush2.msra.mxu0 0.0
    %461 = vmatprep.subr.mxu0 0.0
    %462 = vmatpush2.msra.mxu0 0.0
    %463 = vmatprep.subr.mxu0 0.0
    %464 = vmatpush2.msra.mxu0 0.0
    %465 = vmatprep.subr.mxu0 0.0
    %466 = vmatpush2.msra.mxu0 0.0
    %467 = vmatprep.subr.mxu0 0.0
    %468 = vmatpush2.msra.mxu0 0.0
    %469 = vmatprep.subr.mxu0 0.0
    %470 = vmatpush2.msra.mxu0 0.0
    %471 = vmatprep.subr.mxu0 0.0
    %472 = vmatpush2.msra.mxu0 0.0
    %473 = vmatprep.subr.mxu0 0.0
    %474 = vmatpush2.msra.mxu0 0.0
    %475 = vmatprep.subr.mxu0 0.0
    %476 = vmatpush2.msra.mxu0 0.0
    %477 = vmatprep.subr.mxu0 0.0
    %478 = vmatpush2.msra.mxu0 0.0
    %479 = vmatprep.subr.mxu0 0.0
    %480 = vmatpush2.msra.mxu0 0.0
    %481 = vmatprep.subr.mxu0 0.0
    %482 = vmatpush2.msra.mxu0 0.0
    %483 = vmatprep.subr.mxu0 0.0
    %484 = vmatpush2.msra.mxu0 0.0
    %485 = vmatprep.subr.mxu0 0.0
    %486 = vmatpush2.msra.mxu0 0.0
    %487 = vmatprep.subr.mxu0 0.0
    %488 = vmatpush2.msra.mxu0 0.0
    %489 = vmatprep.mubr.f32.mxu0 0.0
    %490 = vmatmul.mubr.f32.gmra.mxu0 %v420
    %v491 = vpop.f32.mrf.mxu0
    %v492 = vadd.f32 %v418, %v491
    %v493 = vpop.f32.mrf.mxu0
    %494 = vmatprep.mubr.f32.mxu0 0.0
    %495 = vmatmul.mubr.f32.gmra.mxu0 %v423
    %v496 = vpop.f32.mrf.mxu0
    %v497 = vadd.f32 %v418, %v496
    %v498 = vpop.f32.mrf.mxu0
    %499 = vdwg.mxu0
    %v500 = vmul.f32 %v492, 0.70710677
    %v501 = vmul.f32 %v497, 0.70710677
    %v502 = vand.u32 2147483647, %v500
    %v503 = vand.u32 2147483647, %v501
    %v504 = vmul.f32 %v502, 0.3275911
    %v505 = vmul.f32 %v503, 0.3275911
    %v506 = vadd.f32 %v504, 1.0
    %v507 = vadd.f32 %v505, 1.0
    %v508 = vrcp.pop %v506
    %v509 = vmul.f32 1.0, %v508
    %v510 = vrcp.pop %v507
    %v511 = vmul.f32 1.0, %v510
    %v512 = vmul.f32 %v509, 1.0614054
    %v513 = vmul.f32 %v511, 1.0614054
    %v514 = vadd.f32 %v512, -1.4531521
    %v515 = vadd.f32 %v513, -1.4531521
    %v516 = vmul.f32 %v514, %v509
    %v517 = vmul.f32 %v515, %v511
    %v518 = vadd.f32 %v516, 1.4214138
    %v519 = vadd.f32 %v517, 1.4214138
    %v520 = vmul.f32 %v518, %v509
    %v521 = vmul.f32 %v519, %v511
    %v522 = vadd.f32 %v520, -0.28449672
    %v523 = vadd.f32 %v521, -0.28449672
    %v524 = vmul.f32 %v522, %v509
    %v525 = vmul.f32 %v523, %v511
    %v526 = vadd.f32 %v524, 0.2548296
    %v527 = vadd.f32 %v525, 0.2548296
    %v528 = vmul.f32 %v526, %v509
    %v529 = vmul.f32 %v527, %v511
    %v530 = vsub.f32 0.0, %v502
    %v531 = vsub.f32 0.0, %v503
    %v532 = vmul.f32 %v530, %v502
    %v533 = vmul.f32 %v531, %v503
    %v534 = vmul.f32 %v532, 1.442695
    %v535 = vpow.pop %v534
    %v536 = vmul.f32 %v533, 1.442695
    %v537 = vpow.pop %v536
    %v538 = vmul.f32 %v528, %v535
    %v539 = vmul.f32 %v529, %v537
    %v540 = vsub.f32 1.0, %v538
    %v541 = vsub.f32 1.0, %v539
    %vm542 = vcmp.lt.f32.partialorder %v500, 0.0
    %vm543 = vcmp.lt.f32.partialorder %v501, 0.0
    %v544 = vsub.f32 0.0, %v540
    %v545 = vsub.f32 0.0, %v541
    %v546 = vsel %vm542, %v544, %v540
    %v547 = vsel %vm543, %v545, %v541
    %v548 = vmul.f32 %v492, 0.5
    %v549 = vmul.f32 %v497, 0.5
    %v550 = vadd.f32 %v546, 1.0
    %v551 = vadd.f32 %v547, 1.0
    %v552 = vmul.f32 %v548, %v550
    %v553 = vmul.f32 %v549, %v551
    %v554 = vlaneseq
    %v555 = vshrl.u32 %v554, 7
    %v556 = vsub.s32 4, %v555
    %v557 = vrot.slane %v104, %v556
    %vm558 = vcmask 523264
    %v560 = vsel %vm558, %v552, 0
    %v563 = vsel %vm558, %v553, 0
    %565 = vmatprep.subr.mxu0 0.0
    %566 = vmatpush1.msra.mxu0 0.0
    %567 = vmatprep.subr.mxu0 0.0
    %568 = vmatpush1.msra.mxu0 0.0
    %569 = vmatprep.subr.mxu0 0.0
    %570 = vmatpush1.msra.mxu0 0.0
    %571 = vmatprep.subr.mxu0 0.0
    %572 = vmatpush1.msra.mxu0 0.0
    %573 = vmatprep.subr.mxu0 0.0
    %574 = vmatpush1.msra.mxu0 0.0
    %575 = vmatprep.subr.mxu0 0.0
    %576 = vmatpush1.msra.mxu0 0.0
    %577 = vmatprep.subr.mxu0 0.0
    %578 = vmatpush1.msra.mxu0 0.0
    %579 = vmatprep.subr.mxu0 0.0
    %580 = vmatpush1.msra.mxu0 0.0
    %581 = vmatprep.subr.mxu0 0.0
    %582 = vmatpush1.msra.mxu0 %v103
    %583 = vmatprep.subr.mxu0 0.0
    %584 = vmatpush1.msra.mxu0 %v102
    %585 = vmatprep.subr.mxu0 0.0
    %586 = vmatpush1.msra.mxu0 %v101
    %587 = vmatprep.subr.mxu0 0.0
    %588 = vmatpush1.msra.mxu0 %v100
    %589 = vmatprep.subr.mxu0 0.0
    %590 = vmatpush1.msra.mxu0 %v99
    %591 = vmatprep.subr.mxu0 0.0
    %592 = vmatpush1.msra.mxu0 %v98
    %593 = vmatprep.subr.mxu0 0.0
    %594 = vmatpush1.msra.mxu0 %v97
    %595 = vmatprep.subr.mxu0 0.0
    %596 = vmatpush1.msra.mxu0 %v96
    %597 = vmatprep.subr.mxu0 0.0
    %598 = vmatpush2.msra.mxu0 0.0
    %599 = vmatprep.subr.mxu0 0.0
    %600 = vmatpush2.msra.mxu0 0.0
    %601 = vmatprep.subr.mxu0 0.0
    %602 = vmatpush2.msra.mxu0 0.0
    %603 = vmatprep.subr.mxu0 0.0
    %604 = vmatpush2.msra.mxu0 0.0
    %605 = vmatprep.subr.mxu0 0.0
    %606 = vmatpush2.msra.mxu0 0.0
    %607 = vmatprep.subr.mxu0 0.0
    %608 = vmatpush2.msra.mxu0 0.0
    %609 = vmatprep.subr.mxu0 0.0
    %610 = vmatpush2.msra.mxu0 0.0
    %611 = vmatprep.subr.mxu0 0.0
    %612 = vmatpush2.msra.mxu0 0.0
    %613 = vmatprep.subr.mxu0 0.0
    %614 = vmatpush2.msra.mxu0 0.0
    %615 = vmatprep.subr.mxu0 0.0
    %616 = vmatpush2.msra.mxu0 0.0
    %617 = vmatprep.subr.mxu0 0.0
    %618 = vmatpush2.msra.mxu0 0.0
    %619 = vmatprep.subr.mxu0 0.0
    %620 = vmatpush2.msra.mxu0 0.0
    %621 = vmatprep.subr.mxu0 0.0
    %622 = vmatpush2.msra.mxu0 0.0
    %623 = vmatprep.subr.mxu0 0.0
    %624 = vmatpush2.msra.mxu0 0.0
    %625 = vmatprep.subr.mxu0 0.0
    %626 = vmatpush2.msra.mxu0 0.0
    %627 = vmatprep.subr.mxu0 0.0
    %628 = vmatpush2.msra.mxu0 0.0
    %629 = vmatprep.mubr.f32.mxu0 0.0
    %630 = vmatmul.mubr.f32.gmra.mxu0 %v560
    %v631 = vpop.f32.mrf.mxu0
    %v632 = vadd.f32 %v557, %v631
    %v633 = vpop.f32.mrf.mxu0
    %634 = vmatprep.mubr.f32.mxu0 0.0
    %635 = vmatmul.mubr.f32.gmra.mxu0 %v563
    %v636 = vpop.f32.mrf.mxu0
    %v637 = vadd.f32 %v557, %v636
    %v638 = vpop.f32.mrf.mxu0
    %639 = vdwg.mxu0
    %v640 = vadd.f32 %v632, %v413
    %v641 = vadd.f32 %v637, %v414
    %v642 = vsel %vm203, %v640, 0.0
    %643 = vadd.xlane.f32.xlu0 %v642
    %v644 = vpop.xlane.xlu0 %643
    %v645 = vsel %vm203, %v641, 0.0
    %646 = vadd.xlane.f32.xlu0 %v645
    %v647 = vpop.xlane.xlu0 %646
    %v648 = vmul.f32 %v644, %v376
    %v649 = vmul.f32 %v647, %v376
    %v650 = vmul.f32 %v640, %v640
    %v651 = vmul.f32 %v641, %v641
    %v652 = vsel %vm203, %v650, 0.0
    %653 = vadd.xlane.f32.xlu0 %v652
    %v654 = vpop.xlane.xlu0 %653
    %v655 = vsel %vm203, %v651, 0.0
    %656 = vadd.xlane.f32.xlu0 %v655
    %v657 = vpop.xlane.xlu0 %656
    %v658 = vmul.f32 %v654, %v376
    %v659 = vmul.f32 %v657, %v376
    %v660 = vmul.f32 %v648, %v648
    %v661 = vmul.f32 %v649, %v649
    %v662 = vsub.f32 %v658, %v660
    %v663 = vsub.f32 %v659, %v661
    %v664 = vmax.f32 %v662, 0.0
    %v665 = vmax.f32 %v663, 0.0
    %v666 = vsub.f32 %v640, %v648
    %v667 = vsub.f32 %v641, %v649
    %v668 = vadd.f32 %v664, 1e-12
    %v669 = vadd.f32 %v665, 1e-12
    %v670 = vrsqrt.pop %v668
    %v671 = vrsqrt.pop %v669
    %v672 = vmul.f32 %v666, %v670
    %v673 = vmul.f32 %v667, %v671
    %v674 = vlaneseq
    %v675 = vshrl.u32 %v674, 7
    %v676 = vsub.s32 2, %v675
    %v677 = vrot.slane %v104, %v676
    %v678 = vmul.f32 %v672, %v677
    %v679 = vmul.f32 %v673, %v677
    %v680 = vlaneseq
    %v681 = vshrl.u32 %v680, 7
    %v682 = vsub.s32 3, %v681
    %v683 = vrot.slane %v104, %v682
    %v684 = vadd.f32 %v678, %v683
    %v685 = vadd.f32 %v679, %v683
    %686 = vst.msk [vmem:[#allocation8] sm:$0xff] %vm203, %v684
    %687 = vst.msk [vmem:[#allocation8 + $0x8] sm:$0xff] %vm203, %v685
    // Predicated region
    $region26: #{tpu_custom_call.1} parent=1 // pred_check
      _
    $region27: #{tpu_custom_call.1} parent=1 // pred_check_branch
      %689 = sbr.rel (0) target = $region29
    $region28: #{tpu_custom_call.1} parent=1 // pred_region
      %s691 = ssub.s32 256, 256
      %692 = vsyncadd [#allocation4], %s691
      %s693 = sshll.u32 [#allocation8], 4
      %s694 = int_to_ptr.vmem [resolvable:$true] %s693
      %699 = dma.vmem_to_hbm [thread:$0]  %s694, 256, %s3, [#allocation4], 128, 128, 8
    $region29: #{tpu_custom_call.1} parent=1 // pred_fallthru
      _
    // Predicated region
    $region30: #{tpu_custom_call.1} parent=1 // pred_check
      _
    $region31: #{tpu_custom_call.1} parent=1 // pred_check_branch
      %701 = sbr.rel (0) target = $region33
    $region32: #{tpu_custom_call.1} parent=1 // pred_region
      %702 = dma.done [#allocation4], 256
    $region33: #{tpu_custom_call.1} parent=1 // pred_fallthru
      _
    %703 = vsyncpa [#allocation3], 1
    %704 = vsyncpa [#allocation6], 1
    %705 = vsyncpa [#allocation4], 1

</llo_original>
